<compile_context>
chip_gen: v7x
topology: tpu7x:2x2x1
jax: 0.10.0
libtpu: 0.0.40
codegen_flags: <defaults>
</compile_context>

<pallas_src>
import jax
import jax.numpy as jnp
from jax.experimental import pallas as pl
from jax.experimental.pallas import tpu as pltpu


def _patch_encoder_kernel(x_ref, w_ref, pos_ref, o_ref):
    # x_ref:   (TP, C)   one tile of patches for one batch element
    # w_ref:   (C, Dp)   projection weight (already transposed, lane-padded)
    # pos_ref: (TP, Dp)  positional-embedding tile (bias already folded in)
    # o_ref:   (TP, Dp)
    proj = jnp.dot(x_ref[...], w_ref[...],
                   preferred_element_type=jnp.float32)      # MXU, f32 accum
    o_ref[...] = (proj + pos_ref[...]).astype(o_ref.dtype)  # VPU add


def _pick_patch_tile(P, cap=512):
    """Largest tile of the patch axis that is a divisor of P, a multiple of 8
    (sublane) and <= cap; falls back to the full axis (always legal)."""
    if P <= cap:
        return P
    for t in range(cap, 7, -1):
        if P % t == 0 and t % 8 == 0:
            return t
    return P


def patch_encoder(x, w, b, pos_emb):
    """x: (B, P, C) f32; w: (C, D); b: (D,); pos_emb: (P, D) -> (B, P, D)."""
    B, P, C = x.shape
    D = w.shape[1]

    # Fold the Linear bias into the positional table once (O(P*D), done once
    # instead of per batch element inside the kernel).
    pos_plus_b = pos_emb + b[None, :]

    # Lane-dense output: pad the projection dim to a multiple of 128.
    Dp = ((D + 127) // 128) * 128
    if Dp != D:
        w = jnp.pad(w, ((0, 0), (0, Dp - D)))
        pos_plus_b = jnp.pad(pos_plus_b, ((0, 0), (0, Dp - D)))

    TP = _pick_patch_tile(P)
    n_pt = P // TP

    # VMEM budget (f32): double-buffer everything for safety + headroom.
    itemsize = 4
    vmem_bytes = 2 * itemsize * (TP * C + C * Dp + 2 * TP * Dp) + (4 << 20)
    vmem_bytes = int(min(max(vmem_bytes, 16 << 20), 60 << 20))

    # TODO(synk): if channel_dim ever gets large, add a trailing "arbitrary"
    # K grid axis with a f32 VMEM accumulator (pl.when init/finalize).
    out = pl.pallas_call(
        _patch_encoder_kernel,
        out_shape=jax.ShapeDtypeStruct((B, P, Dp), jnp.float32),
        grid_spec=pltpu.PrefetchScalarGridSpec(
            num_scalar_prefetch=0,
            # patch-tile axis outermost so weight/pos block indices are
            # constant across the inner batch loop (no redundant re-fetch).
            grid=(n_pt, B),
            in_specs=[
                pl.BlockSpec((pl.Squeezed(), TP, C),
                             lambda pi, bi: (bi, pi, 0)),      # x tile
                pl.BlockSpec((C, Dp), lambda pi, bi: (0, 0)),  # weight (full)
                pl.BlockSpec((TP, Dp), lambda pi, bi: (pi, 0)),# pos+bias tile
            ],
            out_specs=pl.BlockSpec((pl.Squeezed(), TP, Dp),
                                   lambda pi, bi: (bi, pi, 0)),
        ),
        compiler_params=pltpu.CompilerParams(
            dimension_semantics=("parallel", "parallel"),
            vmem_limit_bytes=vmem_bytes),
    )(x, w, pos_plus_b)

    return out[..., :D] if Dp != D else out


if __name__ == "__main__":
    # Small, module-consistent shapes.
    B = 2            # batch
    P = 8            # num_patches
    C = 4            # channel_dim (per-patch feature dim)
    D = 32           # proj_dim

    key = jax.random.PRNGKey(0)
    k_x, k_w, k_b, k_pos = jax.random.split(key, 4)

    x = jax.random.normal(k_x, (B, P, C), dtype=jnp.float32)
    # Deterministic synthetic params (shapes from nn.Linear / nn.Embedding).
    w = jax.random.normal(k_w, (C, D), dtype=jnp.float32) * 0.1   # Linear weight^T
    b = jax.random.normal(k_b, (D,), dtype=jnp.float32) * 0.1     # Linear bias
    pos_emb = jax.random.normal(k_pos, (P, D), dtype=jnp.float32) # Embedding table

    out = patch_encoder(x, w, b, pos_emb)
    out = jax.block_until_ready(out)

    # Reference check in plain JAX (same math as the PyTorch forward).
    ref = jnp.einsum("bpc,cd->bpd", x, w) + b[None, None, :] + pos_emb[None, :, :]
    assert out.shape == (B, P, D)
    assert jnp.allclose(out, ref, atol=1e-5, rtol=1e-5)

    print("KERNEL_OK")
</pallas_src>

<mosaic_0001>
module attributes {stable_mosaic.version = 11 : i64} {
  func.func @_patch_encoder_kernel(%arg0: i32, %arg1: i32, %arg2: memref<1x8x4xf32, #tpu.memory_space<vmem>>, %arg3: memref<4x128xf32, #tpu.memory_space<vmem>>, %arg4: memref<8x128xf32, #tpu.memory_space<vmem>>, %arg5: memref<1x8x128xf32, #tpu.memory_space<vmem>>) attributes {dimension_semantics = [#tpu.dimension_semantics<parallel>, #tpu.dimension_semantics<parallel>], iteration_bounds = array<i64: 1, 2>, scalar_prefetch = 0 : i64, scratch_operands = 0 : i64, tpu.core_type = #tpu.core_type<tc>, window_params = [{transform_indices = @transform_0, window_bounds = array<i64: 1, 8, 4>}, {pipeline_mode = #tpu.pipeline_mode<synchronous>, transform_indices = @transform_1, window_bounds = array<i64: 4, 128>}, {transform_indices = @transform_2, window_bounds = array<i64: 8, 128>}, {transform_indices = @transform_3, window_bounds = array<i64: 1, 8, 128>}]} {
    %c0 = arith.constant 0 : index
    %c0_0 = arith.constant 0 : index
    %c0_1 = arith.constant 0 : index
    %0 = vector.load %arg2[%c0, %c0_0, %c0_1] : memref<1x8x4xf32, #tpu.memory_space<vmem>>, vector<1x8x4xf32>
    %1 = vector.shape_cast %0 : vector<1x8x4xf32> to vector<8x4xf32>
    %c0_2 = arith.constant 0 : index
    %c0_3 = arith.constant 0 : index
    %2 = vector.load %arg3[%c0_2, %c0_3] : memref<4x128xf32, #tpu.memory_space<vmem>>, vector<4x128xf32>
    %cst = arith.constant dense<0.000000e+00> : vector<8x128xf32>
    %3 = tpu.matmul %1, %2, %cst {dimension_numbers = #tpu.dot_dimension_numbers<[1], [0], [0], [1], [0, 0, 1, 1], [], []>} : vector<8x4xf32>, vector<4x128xf32>, vector<8x128xf32> -> vector<8x128xf32>
    %c0_4 = arith.constant 0 : index
    %c0_5 = arith.constant 0 : index
    %4 = vector.load %arg4[%c0_4, %c0_5] : memref<8x128xf32, #tpu.memory_space<vmem>>, vector<8x128xf32>
    %5 = arith.addf %3, %4 : vector<8x128xf32>
    %c0_6 = arith.constant 0 : index
    %c0_7 = arith.constant 0 : index
    %c0_8 = arith.constant 0 : index
    %6 = vector.load %arg5[%c0_6, %c0_7, %c0_8] : memref<1x8x128xf32, #tpu.memory_space<vmem>>, vector<1x8x128xf32>
    %7 = vector.shape_cast %6 : vector<1x8x128xf32> to vector<8x128xf32>
    %8 = vector.shape_cast %5 : vector<8x128xf32> to vector<1x8x128xf32>
    tpu.vector_store %arg5[%c0_6, %c0_7, %c0_8], %8 {strides = array<i32>} : memref<1x8x128xf32, #tpu.memory_space<vmem>>, vector<1x8x128xf32>,
    return
  }
  func.func @transform_0(%arg0: i32, %arg1: i32) -> (i32, i32, i32) {
    %c0_i32 = arith.constant 0 : i32
    %c0_i32_0 = arith.constant 0 : i32
    return %arg1, %arg0, %c0_i32 : i32, i32, i32
  }
  func.func @transform_1(%arg0: i32, %arg1: i32) -> (i32, i32) {
    %c0_i32 = arith.constant 0 : i32
    %c0_i32_0 = arith.constant 0 : i32
    %c0_i32_1 = arith.constant 0 : i32
    return %c0_i32, %c0_i32_0 : i32, i32
  }
  func.func @transform_2(%arg0: i32, %arg1: i32) -> (i32, i32) {
    %c0_i32 = arith.constant 0 : i32
    %c0_i32_0 = arith.constant 0 : i32
    return %arg0, %c0_i32 : i32, i32
  }
  func.func @transform_3(%arg0: i32, %arg1: i32) -> (i32, i32, i32) {
    %c0_i32 = arith.constant 0 : i32
    %c0_i32_0 = arith.constant 0 : i32
    return %arg1, %arg0, %c0_i32 : i32, i32, i32
  }
}

</mosaic_0001>

<llo_original>
// kernel: tpu_custom_call.1
$region0: #{tpu_custom_call.1}
  #allocation0 [shape = 'u32[]', space=smem, size = 0x4, offset = 0x4, fixed_abs, tag = 'smem constant byte address 0x4 - core index']
  #allocation1 [shape = 'u32[144,128]{1,0:T(1,128)}', space=vmem, size = 0x12000, scoped, tag = 'internal scratch']
  %s0 = inlined_call_operand.vmem [shape: f32[2,8,4], index: 0, kind: input, shape index: {}]
  %s1 = inlined_call_operand.vmem [shape: f32[4,128], index: 1, kind: input, shape index: {}]
  %s2 = inlined_call_operand.vmem [shape: f32[8,128], index: 2, kind: input, shape index: {}]
  %s3 = inlined_call_operand.hbm [shape: f32[2,8,128], index: 3, kind: output, shape index: {}]
  %s4 = sld [smem:[#allocation0]]
  $region45: #{tpu_custom_call.1} parent=0
    _
  %s6 = ssub.s32 1, %s4
  %s7 = scalar_select 0, %s6, %s4
  $region1: #{tpu_custom_call.1} parent=0
    #allocation2 [shape = 'u8[8192]{0}', space=vmem, size = 0x2000, scoped, tag = 'output window, operand 0']
    #allocation3 [shape = 's32[2]{0}', space=sflag, size = 0x8, scoped, tag = 'scoped memory for tpu_custom_call.1']
    %8 = vsyncpa [#allocation3], 0
    %s9 = scalar_lea.sflag [#allocation3], 1
    %10 = vsyncpa %s9, 0
    loop: start=0, step=1, limit=4
    $region2: #{tpu_custom_call.1} parent=1 // loop_pre_header
      _
    $region3: #{tpu_custom_call.1} parent=1 // loop_header
      %s12 = sphi 0, %s16
      %p13 = scmp.ge.s32.totalorder %s12, 4
      %s19 = sphi 0, %s31
      %s20 = sphi 0, %s27
      %s21 = sphi 0, %s19
      %s22 = sphi 0, %s20
      %s23 = sphi 0, %s21
      %s24 = sphi 0, %s22
      %s36 = sphi 0, %s38
      %s39 = sphi 0, %s36
      %s40 = sphi 0, %s39
      %s56 = sphi 0, %s40
      %s60 = sphi 0, %s60
      %s62 = sphi 0, %s60
      %s63 = sphi 0, %s62
      %s77 = sphi 0, %s63
      %s83 = sphi 0, %s85
      %s86 = sphi 0, %s83
      %s87 = sphi 0, %s86
      %s103 = sphi 0, %s87
      %s111 = sphi 0, %s113
      %s114 = sphi 0, %s111
      %s115 = sphi 0, %s114
      %s131 = sphi 0, %s115
    $region4: #{tpu_custom_call.1} parent=1 // loop_header_branch
      %15 = sbr.rel (%p13) target = $region8
    $region5: #{tpu_custom_call.1} parent=1 // loop_body
      %s17 = ssub.s32 %s12, 1
      %s18 = ssub.s32 %s12, 2
      %s25 = sadd.s32 1, %s20
      %p26 = scmp.ge.s32.totalorder %s25, 2
      %s27 = scalar_select %p26, 0, %s25
      %s28 = sadd.s32 1, %s19
      %s29 = scalar_select %p26, %s28, %s19
      %p30 = scmp.ge.s32.totalorder %s29, 1
      %s31 = scalar_select %p30, 0, %s29
      %s32 = ssub.s32 %s20, %s27
      %s33 = ssub.s32 %s19, %s31
      %s34 = sor.u32 %s32, %s33
      %p35 = scmp.eq.s32.totalorder %s34, 0
      %s37 = sadd.s32 %s36, 1
      %s38 = scalar_select %p35, %s36, %s37
      %p41 = pneg %p35
      %p42 = scmp.eq.s32.totalorder %s12, 1
      %p43 = por %p41, %p42
      %p44 = scmp.ne.s32.totalorder %s36, %s39
      %p45 = scmp.eq.s32.totalorder %s12, 0
      %p46 = por %p44, %p45
      %p47 = scmp.ne.s32.totalorder %s36, %s39
      %p48 = scmp.eq.s32.totalorder %s17, 1
      %p49 = por %p47, %p48
      %p50 = scmp.ne.s32.totalorder %s39, %s40
      %p51 = scmp.eq.s32.totalorder %s17, 0
      %p52 = por %p50, %p51
      %p53 = scmp.ne.s32.totalorder %s39, %s40
      %p54 = scmp.eq.s32.totalorder %s18, 1
      %p55 = por %p53, %p54
      %p57 = scmp.ne.s32.totalorder %s40, %s56
      %p58 = scmp.eq.s32.totalorder %s18, 0
      %p59 = por %p57, %p58
      %s61 = sadd.s32 %s60, 1
      %p64 = scmp.eq.s32.totalorder %s12, 1
      %p65 = scmp.ne.s32.totalorder %s60, %s62
      %p66 = scmp.eq.s32.totalorder %s12, 0
      %p67 = por %p65, %p66
      %p68 = scmp.ne.s32.totalorder %s60, %s62
      %p69 = scmp.eq.s32.totalorder %s17, 1
      %p70 = por %p68, %p69
      %p71 = scmp.ne.s32.totalorder %s62, %s63
      %p72 = scmp.eq.s32.totalorder %s17, 0
      %p73 = por %p71, %p72
      %p74 = scmp.ne.s32.totalorder %s62, %s63
      %p75 = scmp.eq.s32.totalorder %s18, 1
      %p76 = por %p74, %p75
      %p78 = scmp.ne.s32.totalorder %s63, %s77
      %p79 = scmp.eq.s32.totalorder %s18, 0
      %p80 = por %p78, %p79
      %s81 = ssub.s32 %s19, %s31
      %p82 = scmp.eq.s32.totalorder %s81, 0
      %s84 = sadd.s32 %s83, 1
      %s85 = scalar_select %p82, %s83, %s84
      %p88 = pneg %p82
      %p89 = scmp.eq.s32.totalorder %s12, 1
      %p90 = por %p88, %p89
      %p91 = scmp.ne.s32.totalorder %s83, %s86
      %p92 = scmp.eq.s32.totalorder %s12, 0
      %p93 = por %p91, %p92
      %p94 = scmp.ne.s32.totalorder %s83, %s86
      %p95 = scmp.eq.s32.totalorder %s17, 1
      %p96 = por %p94, %p95
      %p97 = scmp.ne.s32.totalorder %s86, %s87
      %p98 = scmp.eq.s32.totalorder %s17, 0
      %p99 = por %p97, %p98
      %p100 = scmp.ne.s32.totalorder %s86, %s87
      %p101 = scmp.eq.s32.totalorder %s18, 1
      %p102 = por %p100, %p101
      %p104 = scmp.ne.s32.totalorder %s87, %s103
      %p105 = scmp.eq.s32.totalorder %s18, 0
      %p106 = por %p104, %p105
      %s107 = ssub.s32 %s20, %s27
      %s108 = ssub.s32 %s19, %s31
      %s109 = sor.u32 %s107, %s108
      %p110 = scmp.eq.s32.totalorder %s109, 0
      %s112 = sadd.s32 %s111, 1
      %s113 = scalar_select %p110, %s111, %s112
      %p116 = pneg %p110
      %p117 = scmp.eq.s32.totalorder %s12, 1
      %p118 = por %p116, %p117
      %p119 = scmp.ne.s32.totalorder %s111, %s114
      %p120 = scmp.eq.s32.totalorder %s12, 0
      %p121 = por %p119, %p120
      %p122 = scmp.ne.s32.totalorder %s111, %s114
      %p123 = scmp.eq.s32.totalorder %s17, 1
      %p124 = por %p122, %p123
      %p125 = scmp.ne.s32.totalorder %s114, %s115
      %p126 = scmp.eq.s32.totalorder %s17, 0
      %p127 = por %p125, %p126
      %p128 = scmp.ne.s32.totalorder %s114, %s115
      %p129 = scmp.eq.s32.totalorder %s18, 1
      %p130 = por %p128, %p129
      %p132 = scmp.ne.s32.totalorder %s115, %s131
      %p133 = scmp.eq.s32.totalorder %s18, 0
      %p134 = por %p132, %p133
      %p135 = scmp.le.s32.totalorder 1, %s12
      %p136 = scmp.lt.s32.totalorder %s12, 3
      %p137 = pnand %p135, %p136
      %p138 = pneg %p137
      // Predicated region
      $region9: #{tpu_custom_call.1} parent=5 // pred_check
        _
      $region10: #{tpu_custom_call.1} parent=5 // pred_check_branch
        %140 = sbr.rel (%p137) target = $region12
      $region11: #{tpu_custom_call.1} parent=5 // pred_region
        %s141 = ssub.s32 %s12, 1
        // Predicated region
        $region13: #{tpu_custom_call.1} parent=11 // pred_check
          %p142 = pneg %p73
        $region14: #{tpu_custom_call.1} parent=11 // pred_check_branch
          %144 = sbr.rel (%p142) target = $region16
        $region15: #{tpu_custom_call.1} parent=11 // pred_region
          _
        $region16: #{tpu_custom_call.1} parent=11 // pred_fallthru
          _
        // Predicated region
        $region17: #{tpu_custom_call.1} parent=11 // pred_check
          %p145 = pneg %p99
        $region18: #{tpu_custom_call.1} parent=11 // pred_check_branch
          %147 = sbr.rel (%p145) target = $region20
        $region19: #{tpu_custom_call.1} parent=11 // pred_region
          %p148 = scmp.lt.s32.totalorder %s21, 0
          %s149 = scalar_select %p148, %s21, 0
          %s150 = smul.addr %s149, 8
          %s151 = scalar_lea.vmem %s2, %s150
        $region20: #{tpu_custom_call.1} parent=11 // pred_fallthru
          _
      $region12: #{tpu_custom_call.1} parent=5 // pred_fallthru
        _
      %p152 = scmp.lt.s32.totalorder %s12, 2
      // Predicated region
      $region21: #{tpu_custom_call.1} parent=5 // pred_check
        %p153 = pneg %p152
      $region22: #{tpu_custom_call.1} parent=5 // pred_check_branch
        %155 = sbr.rel (%p153) target = $region24
      $region23: #{tpu_custom_call.1} parent=5 // pred_region
        // Predicated region
        $region25: #{tpu_custom_call.1} parent=23 // pred_check
          %p156 = pneg %p46
        $region26: #{tpu_custom_call.1} parent=23 // pred_check_branch
          %158 = sbr.rel (%p156) target = $region28
        $region27: #{tpu_custom_call.1} parent=23 // pred_region
          %p159 = scmp.lt.s32.totalorder %s20, 1
          %s160 = scalar_select %p159, %s20, 1
          %p161 = scmp.lt.s32.totalorder %s19, 0
          %s162 = scalar_select %p161, %s19, 0
          %s163 = sadd.s32 %s162, %s160
          %s164 = smul.addr %s163, 8
          %s165 = scalar_lea.vmem %s0, %s164
        $region28: #{tpu_custom_call.1} parent=23 // pred_fallthru
          _
      $region24: #{tpu_custom_call.1} parent=5 // pred_fallthru
        _
      %p166 = scmp.le.s32.totalorder 1, %s12
      %p167 = scmp.lt.s32.totalorder %s12, 3
      %p168 = pnand %p166, %p167
      %p169 = pneg %p168
      // Predicated region
      $region29: #{tpu_custom_call.1} parent=5 // pred_check
        _
      $region30: #{tpu_custom_call.1} parent=5 // pred_check_branch
        %171 = sbr.rel (%p168) target = $region32
      $region31: #{tpu_custom_call.1} parent=5 // pred_region
        %s172 = ssub.s32 %s12, 1
        %p173 = scmp.lt.s32.totalorder %s22, 1
        %s174 = scalar_select %p173, %s22, 1
        %p175 = scmp.lt.s32.totalorder %s21, 0
        %s176 = scalar_select %p175, %s21, 0
        %s177 = sadd.s32 %s176, %s174
        %s178 = smul.addr %s177, 8
        %s179 = scalar_lea.vmem %s0, %s178
        %p180 = pneg %p52
        %p181 = pneg %p49
        %p182 = pneg %p73
        %p183 = pneg %p70
        %p184 = scmp.lt.s32.totalorder %s21, 0
        %s185 = scalar_select %p184, %s21, 0
        %s186 = smul.addr %s185, 8
        %s187 = scalar_lea.vmem %s2, %s186
        %p188 = pneg %p99
        %p189 = pneg %p96
        %p190 = pneg %p127
        %p191 = pneg %p124
        %s192 = sand.u32 %s114, 1
        %s193 = scalar_lea.sflag [#allocation3], %s192
        %s194 = sand.u32 %s114, 1
        %s195 = smul.addr %s194, 8
        %s196 = scalar_lea.vmem [#allocation2], %s195
        %p197 = scmp.lt.s32.totalorder %s22, 1
        %s198 = scalar_select %p197, %s22, 1
        %p199 = scmp.lt.s32.totalorder %s21, 0
        %s200 = scalar_select %p199, %s21, 0
        %s201 = sadd.s32 %s200, %s198
        %s202 = smul.addr %s201, 8
        %s203 = scalar_lea.vmem %s0, %s202
        %p204 = scmp.lt.s32.totalorder %s21, 0
        %s205 = scalar_select %p204, %s21, 0
        %s206 = smul.addr %s205, 8
        %s207 = scalar_lea.vmem %s2, %s206
        %v208 = vld [vmem:[%s203] sm:$0xff]
        %v209 = vld [vmem:[%s1] sm:$0xf]
        %v210 = vld [vmem:[%s207] sm:$0xff]
        %vm211 = vcmask 31744
        %v213 = vsel %vm211, %v208, 0
        %vm215 = vcmask 1043456
        %v217 = vsel %vm215, %v209, 0
        %219 = vmatprep.subr.mxu0 0.0
        %220 = vmatpush1.msra.mxu0 %v217
        %221 = vmatprep.subr.mxu0 0.0
        %222 = vmatpush1.msra.mxu0 0.0
        %223 = vmatprep.subr.mxu0 0.0
        %224 = vmatpush1.msra.mxu0 0.0
        %225 = vmatprep.subr.mxu0 0.0
        %226 = vmatpush1.msra.mxu0 0.0
        %227 = vmatprep.subr.mxu0 0.0
        %228 = vmatpush1.msra.mxu0 0.0
        %229 = vmatprep.subr.mxu0 0.0
        %230 = vmatpush1.msra.mxu0 0.0
        %231 = vmatprep.subr.mxu0 0.0
        %232 = vmatpush1.msra.mxu0 0.0
        %233 = vmatprep.subr.mxu0 0.0
        %234 = vmatpush1.msra.mxu0 0.0
        %235 = vmatprep.subr.mxu0 0.0
        %236 = vmatpush1.msra.mxu0 0.0
        %237 = vmatprep.subr.mxu0 0.0
        %238 = vmatpush1.msra.mxu0 0.0
        %239 = vmatprep.subr.mxu0 0.0
        %240 = vmatpush1.msra.mxu0 0.0
        %241 = vmatprep.subr.mxu0 0.0
        %242 = vmatpush1.msra.mxu0 0.0
        %243 = vmatprep.subr.mxu0 0.0
        %244 = vmatpush1.msra.mxu0 0.0
        %245 = vmatprep.subr.mxu0 0.0
        %246 = vmatpush1.msra.mxu0 0.0
        %247 = vmatprep.subr.mxu0 0.0
        %248 = vmatpush1.msra.mxu0 0.0
        %249 = vmatprep.subr.mxu0 0.0
        %250 = vmatpush1.msra.mxu0 0.0
        %251 = vmatprep.subr.mxu0 0.0
        %252 = vmatpush1.msra.mxu0 0.0
        %253 = vmatprep.subr.mxu0 0.0
        %254 = vmatpush1.msra.mxu0 0.0
        %255 = vmatprep.subr.mxu0 0.0
        %256 = vmatpush1.msra.mxu0 0.0
        %257 = vmatprep.subr.mxu0 0.0
        %258 = vmatpush1.msra.mxu0 0.0
        %259 = vmatprep.subr.mxu0 0.0
        %260 = vmatpush1.msra.mxu0 0.0
        %261 = vmatprep.subr.mxu0 0.0
        %262 = vmatpush1.msra.mxu0 0.0
        %263 = vmatprep.subr.mxu0 0.0
        %264 = vmatpush1.msra.mxu0 0.0
        %265 = vmatprep.subr.mxu0 0.0
        %266 = vmatpush1.msra.mxu0 0.0
        %267 = vmatprep.subr.mxu0 0.0
        %268 = vmatpush1.msra.mxu0 0.0
        %269 = vmatprep.subr.mxu0 0.0
        %270 = vmatpush1.msra.mxu0 0.0
        %271 = vmatprep.subr.mxu0 0.0
        %272 = vmatpush1.msra.mxu0 0.0
        %273 = vmatprep.subr.mxu0 0.0
        %274 = vmatpush1.msra.mxu0 0.0
        %275 = vmatprep.subr.mxu0 0.0
        %276 = vmatpush1.msra.mxu0 0.0
        %277 = vmatprep.subr.mxu0 0.0
        %278 = vmatpush1.msra.mxu0 0.0
        %279 = vmatprep.subr.mxu0 0.0
        %280 = vmatpush1.msra.mxu0 0.0
        %281 = vmatprep.subr.mxu0 0.0
        %282 = vmatpush1.msra.mxu0 0.0
        %283 = vmatprep.mubr.f32.mxu0 0.0
        %284 = vmatmul.mubr.f32.gmra.mrb[0].mxu0 %v213
        %v285 = vpop.f32.mrb[0].mxu0
        %v286 = vadd.f32 %v210, %v285
        %v287 = vpop.f32.mrb[0].mxu0
        %288 = vdwg.mxu0
        %289 = vst [vmem:[%s196] sm:$0xff] %v286
        %s290 = sand.u32 %s114, 1
        %s291 = scalar_lea.sflag [#allocation3], %s290
        %s292 = sand.u32 %s114, 1
        %s293 = smul.addr %s292, 8
        %s294 = scalar_lea.vmem [#allocation2], %s293
        // Predicated region
        $region33: #{tpu_custom_call.1} parent=31 // pred_check
          %p295 = pneg %p124
        $region34: #{tpu_custom_call.1} parent=31 // pred_check_branch
          %297 = sbr.rel (%p295) target = $region36
        $region35: #{tpu_custom_call.1} parent=31 // pred_region
          %s299 = ssub.s32 128, 128
          %300 = vsyncadd %s291, %s299
          %s301 = sadd.s32 %s21, %s22
          %s302 = smul.addr %s301, 128
          %s303 = scalar_lea.hbm %s3, %s302
          %s305 = sshll.u32 %s294, 4
          %s306 = int_to_ptr.vmem [resolvable:$true] %s305
          %308 = dma.vmem_to_hbm [thread:$0]  %s306, 128, %s303, %s291
        $region36: #{tpu_custom_call.1} parent=31 // pred_fallthru
          _
      $region32: #{tpu_custom_call.1} parent=5 // pred_fallthru
        _
      %p309 = scmp.le.s32.totalorder 2, %s12
      // Predicated region
      $region37: #{tpu_custom_call.1} parent=5 // pred_check
        %p310 = pneg %p309
      $region38: #{tpu_custom_call.1} parent=5 // pred_check_branch
        %312 = sbr.rel (%p310) target = $region40
      $region39: #{tpu_custom_call.1} parent=5 // pred_region
        %s313 = ssub.s32 %s12, 2
        // Predicated region
        $region41: #{tpu_custom_call.1} parent=39 // pred_check
          %p314 = pneg %p130
        $region42: #{tpu_custom_call.1} parent=39 // pred_check_branch
          %316 = sbr.rel (%p314) target = $region44
        $region43: #{tpu_custom_call.1} parent=39 // pred_region
          %s317 = sand.u32 %s115, 1
          %s318 = scalar_lea.sflag [#allocation3], %s317
          %s319 = sand.u32 %s115, 1
          %s320 = smul.addr %s319, 8
          %s321 = scalar_lea.vmem [#allocation2], %s320
          %322 = dma.done %s318, 128
        $region44: #{tpu_custom_call.1} parent=39 // pred_fallthru
          _
      $region40: #{tpu_custom_call.1} parent=5 // pred_fallthru
        _
    $region6: #{tpu_custom_call.1} parent=1 // loop_footer
      %s16 = sadd.s32 1, %s12
    $region7: #{tpu_custom_call.1} parent=1 // loop_footer_branch
      %11 = sbr.rel target = $region3
    $region8: #{tpu_custom_call.1} parent=1 // loop_exit
      _
    %323 = vsyncpa [#allocation3], 1
    %s324 = scalar_lea.sflag [#allocation3], 1
    %325 = vsyncpa %s324, 1

</llo_original>
